<compile_context>
chip_gen: v7x
topology: tpu7x:2x2x1
jax: 0.10.0
libtpu: 0.0.40
codegen_flags: <defaults>
</compile_context>

<pallas_src>
import jax
import jax.numpy as jnp
from jax.experimental import pallas as pl
from jax.experimental.pallas import tpu as pltpu

LANE = 128


def _round_up(n, m):
    return (n + m - 1) // m * m


def perceptron_kernel(x_ref, w1_ref, b1_ref, w2_ref, o_ref):
    # Layer 1 on the MXU: bf16 x bf16 -> f32 accumulate.
    h = jnp.dot(x_ref[...], w1_ref[...], preferred_element_type=jnp.float32)
    # Bias add + ReLU in f32 (VPU). b1 is (1, Hp): sublane broadcast.
    h = jnp.maximum(h + b1_ref[...], 0.0)
    # Layer 2 (no bias): cast activations to bf16 for the MXU, f32 accumulate.
    y = jnp.dot(h.astype(jnp.bfloat16), w2_ref[...],
                preferred_element_type=jnp.float32)
    # Sigmoid on the EUP; lane-dense (Dp multiple of 128) unmasked bf16 store.
    o_ref[...] = jax.nn.sigmoid(y).astype(o_ref.dtype)


def prepare_perceptron_params(w1, b1, w2):
    """One-time padding + bf16 cast of the parameters (cache the result)."""
    D_in, H = w1.shape
    D_out = w2.shape[1]
    Hp = _round_up(H, LANE)
    Dp = _round_up(D_out, LANE)

    w1_p = jnp.zeros((D_in, Hp), jnp.bfloat16).at[:, :H].set(
        w1.astype(jnp.bfloat16))
    b1_p = jnp.zeros((1, Hp), jnp.float32).at[:, :H].set(
        jnp.reshape(b1, (1, H)).astype(jnp.float32))
    w2_p = jnp.zeros((Hp, Dp), jnp.bfloat16).at[:H, :D_out].set(
        w2.astype(jnp.bfloat16))
    return (w1_p, b1_p, w2_p, D_out)


def perceptron_forward(x, params, *, tile_b=1024):
    """x: (B, D_in) f32; params: output of prepare_perceptron_params.

    Returns (B, D_out) f32, matching sigmoid(relu(x @ w1 + b1) @ w2).
    """
    w1_p, b1_p, w2_p, D_out = params
    B, D_in = x.shape
    Hp = w1_p.shape[1]
    Dp = w2_p.shape[1]

    # Batch tile: multiple of 16 (bf16 sublane packing), as large as allowed.
    TB = min(tile_b, _round_up(B, 16))
    # v7x megacore: for big batches, guarantee >= 2 grid steps so the
    # "parallel" axis shards across both TensorCores.
    if B > 256:
        TB = min(TB, _round_up(pl.cdiv(B, 2), 256))
    TB = max(16, _round_up(TB, 16))
    B_pad = _round_up(B, TB)

    x_p = x.astype(jnp.bfloat16)
    if B_pad != B:
        x_p = jnp.pad(x_p, ((0, B_pad - B), (0, 0)))

    grid = (B_pad // TB,)

    flops = 2 * B_pad * D_in * Hp + 2 * B_pad * Hp * Dp
    bytes_accessed = (x_p.size * 2 + w1_p.size * 2 + b1_p.size * 4
                      + w2_p.size * 2 + B_pad * Dp * 2)

    out_p = pl.pallas_call(
        perceptron_kernel,
        out_shape=jax.ShapeDtypeStruct((B_pad, Dp), jnp.bfloat16),
        grid_spec=pl.GridSpec(
            grid=grid,
            in_specs=[
                # x: tiled along the batch grid axis.
                pl.BlockSpec((TB, D_in), lambda i: (i, 0)),
                # Weights / bias: same block every step -> VMEM-resident.
                pl.BlockSpec((D_in, Hp), lambda i: (0, 0)),
                pl.BlockSpec((1, Hp), lambda i: (0, 0)),
                pl.BlockSpec((Hp, Dp), lambda i: (0, 0)),
            ],
            out_specs=pl.BlockSpec((TB, Dp), lambda i: (i, 0)),
        ),
        compiler_params=pltpu.CompilerParams(
            # Batch tiles are independent: shard across TCs on v7x megacore.
            dimension_semantics=("parallel",),
        ),
        cost_estimate=pl.CostEstimate(
            flops=flops,
            transcendentals=B_pad * Dp,
            bytes_accessed=bytes_accessed,
        ),
    )(x_p, w1_p, b1_p, w2_p)

    # Slice away batch / lane padding; cast the small useful slab back to f32.
    return out_p[:B, :D_out].astype(jnp.float32)


def _reference(x, w1, b1, w2):
    return jax.nn.sigmoid(
        jnp.maximum(x @ w1 + jnp.reshape(b1, (1, -1)), 0.0) @ w2)


if __name__ == "__main__":
    # Shapes consistent with the module: input_dim=32, hidden=32, out=16.
    B, D_in, H, D_out = 8, 32, 32, 16

    key = jax.random.PRNGKey(0)
    kx, kw1, kb1, kw2 = jax.random.split(key, 4)

    # Deterministic init mimicking nn.Linear's uniform(-1/sqrt(fan_in), ...).
    x = jax.random.normal(kx, (B, D_in), dtype=jnp.float32)
    bound1 = 1.0 / jnp.sqrt(D_in)
    w1 = jax.random.uniform(kw1, (D_in, H), jnp.float32, -bound1, bound1)
    b1 = jax.random.uniform(kb1, (1, H), jnp.float32, -bound1, bound1)
    bound2 = 1.0 / jnp.sqrt(H)
    w2 = jax.random.uniform(kw2, (H, D_out), jnp.float32, -bound2, bound2)

    # One-time parameter preparation (padding + bf16 cast), reused per call.
    params = jax.block_until_ready(prepare_perceptron_params(w1, b1, w2))

    out = jax.block_until_ready(perceptron_forward(x, params))
    ref = _reference(x, w1, b1, w2)
    assert out.shape == (B, D_out)
    # bf16 MXU operands + bf16 output store, f32 accumulation: compare to the
    # f32 reference with a bf16-appropriate tolerance.
    assert jnp.allclose(out, ref, atol=2e-2, rtol=2e-2), (
        float(jnp.max(jnp.abs(out - ref))))

    # Second check: batch padding + multi-step grid with a small tile.
    B2 = 200
    x2 = jax.random.normal(jax.random.PRNGKey(1), (B2, D_in), jnp.float32)
    out2 = jax.block_until_ready(perceptron_forward(x2, params, tile_b=64))
    ref2 = _reference(x2, w1, b1, w2)
    assert out2.shape == (B2, D_out)
    assert jnp.allclose(out2, ref2, atol=2e-2, rtol=2e-2), (
        float(jnp.max(jnp.abs(out2 - ref2))))

    # Third check: large batch, default tile -> >=2 grid steps (megacore path).
    B3 = 1024
    x3 = jax.random.normal(jax.random.PRNGKey(2), (B3, D_in), jnp.float32)
    out3 = jax.block_until_ready(perceptron_forward(x3, params))
    ref3 = _reference(x3, w1, b1, w2)
    assert out3.shape == (B3, D_out)
    assert jnp.allclose(out3, ref3, atol=2e-2, rtol=2e-2), (
        float(jnp.max(jnp.abs(out3 - ref3))))

    print("KERNEL_OK")
</pallas_src>

<mosaic_0001>
module attributes {stable_mosaic.version = 11 : i64} {
  func.func @perceptron_kernel(%arg0: i32, %arg1: memref<16x32xbf16, #tpu.memory_space<vmem>>, %arg2: memref<32x128xbf16, #tpu.memory_space<vmem>>, %arg3: memref<1x128xf32, #tpu.memory_space<vmem>>, %arg4: memref<128x128xbf16, #tpu.memory_space<vmem>>, %arg5: memref<16x128xbf16, #tpu.memory_space<vmem>>) attributes {dimension_semantics = [#tpu.dimension_semantics<parallel>], iteration_bounds = array<i64: 1>, scalar_prefetch = 0 : i64, scratch_operands = 0 : i64, tpu.core_type = #tpu.core_type<tc>, window_params = [{transform_indices = @transform_0, window_bounds = array<i64: 16, 32>}, {pipeline_mode = #tpu.pipeline_mode<synchronous>, transform_indices = @transform_1, window_bounds = array<i64: 32, 128>}, {pipeline_mode = #tpu.pipeline_mode<synchronous>, transform_indices = @transform_2, window_bounds = array<i64: 1, 128>}, {pipeline_mode = #tpu.pipeline_mode<synchronous>, transform_indices = @transform_3, window_bounds = array<i64: 128, 128>}, {transform_indices = @transform_4, window_bounds = array<i64: 16, 128>}]} {
    %c0 = arith.constant 0 : index
    %c0_0 = arith.constant 0 : index
    %0 = vector.load %arg1[%c0, %c0_0] : memref<16x32xbf16, #tpu.memory_space<vmem>>, vector<16x32xbf16>
    %c0_1 = arith.constant 0 : index
    %c0_2 = arith.constant 0 : index
    %1 = vector.load %arg2[%c0_1, %c0_2] : memref<32x128xbf16, #tpu.memory_space<vmem>>, vector<32x128xbf16>
    %cst = arith.constant dense<0.000000e+00> : vector<16x128xf32>
    %2 = tpu.matmul %0, %1, %cst {dimension_numbers = #tpu.dot_dimension_numbers<[1], [0], [0], [1], [0, 0, 1, 1], [], []>} : vector<16x32xbf16>, vector<32x128xbf16>, vector<16x128xf32> -> vector<16x128xf32>
    %c0_3 = arith.constant 0 : index
    %c0_4 = arith.constant 0 : index
    %3 = vector.load %arg3[%c0_3, %c0_4] : memref<1x128xf32, #tpu.memory_space<vmem>>, vector<1x128xf32>
    %4 = vector.broadcast %3 : vector<1x128xf32> to vector<16x128xf32>
    %5 = arith.addf %2, %4 : vector<16x128xf32>
    %cst_5 = arith.constant 0.000000e+00 : f32
    %6 = vector.broadcast %cst_5 : f32 to vector<16x128xf32>
    %7 = arith.maximumf %5, %6 : vector<16x128xf32>
    %8 = arith.truncf %7 : vector<16x128xf32> to vector<16x128xbf16>
    %c0_6 = arith.constant 0 : index
    %c0_7 = arith.constant 0 : index
    %9 = vector.load %arg4[%c0_6, %c0_7] : memref<128x128xbf16, #tpu.memory_space<vmem>>, vector<128x128xbf16>
    %cst_8 = arith.constant dense<0.000000e+00> : vector<16x128xf32>
    %10 = tpu.matmul %8, %9, %cst_8 {dimension_numbers = #tpu.dot_dimension_numbers<[1], [0], [0], [1], [0, 0, 1, 1], [], []>} : vector<16x128xbf16>, vector<128x128xbf16>, vector<16x128xf32> -> vector<16x128xf32>
    %11 = arith.negf %10 : vector<16x128xf32>
    %12 = math.exp %11 : vector<16x128xf32>
    %cst_9 = arith.constant 1.000000e+00 : f32
    %13 = vector.broadcast %cst_9 : f32 to vector<16x128xf32>
    %14 = arith.addf %13, %12 : vector<16x128xf32>
    %15 = arith.divf %13, %14 : vector<16x128xf32>
    %16 = arith.truncf %15 : vector<16x128xf32> to vector<16x128xbf16>
    %c0_10 = arith.constant 0 : index
    %c0_11 = arith.constant 0 : index
    %17 = vector.load %arg5[%c0_10, %c0_11] : memref<16x128xbf16, #tpu.memory_space<vmem>>, vector<16x128xbf16>
    tpu.vector_store %arg5[%c0_10, %c0_11], %16 {strides = array<i32>} : memref<16x128xbf16, #tpu.memory_space<vmem>>, vector<16x128xbf16>,
    return
  }
  func.func @transform_0(%arg0: i32) -> (i32, i32) {
    %c0_i32 = arith.constant 0 : i32
    %c0_i32_0 = arith.constant 0 : i32
    return %arg0, %c0_i32 : i32, i32
  }
  func.func @transform_1(%arg0: i32) -> (i32, i32) {
    %c0_i32 = arith.constant 0 : i32
    %c0_i32_0 = arith.constant 0 : i32
    %c0_i32_1 = arith.constant 0 : i32
    return %c0_i32, %c0_i32_0 : i32, i32
  }
  func.func @transform_2(%arg0: i32) -> (i32, i32) {
    %c0_i32 = arith.constant 0 : i32
    %c0_i32_0 = arith.constant 0 : i32
    %c0_i32_1 = arith.constant 0 : i32
    return %c0_i32, %c0_i32_0 : i32, i32
  }
  func.func @transform_3(%arg0: i32) -> (i32, i32) {
    %c0_i32 = arith.constant 0 : i32
    %c0_i32_0 = arith.constant 0 : i32
    %c0_i32_1 = arith.constant 0 : i32
    return %c0_i32, %c0_i32_0 : i32, i32
  }
  func.func @transform_4(%arg0: i32) -> (i32, i32) {
    %c0_i32 = arith.constant 0 : i32
    %c0_i32_0 = arith.constant 0 : i32
    return %arg0, %c0_i32 : i32, i32
  }
}

</mosaic_0001>

<llo_original>
// kernel: tpu_custom_call.1
$region0: #{tpu_custom_call.1}
  #allocation0 [shape = 'u32[]', space=smem, size = 0x4, offset = 0x4, fixed_abs, tag = 'smem constant byte address 0x4 - core index']
  #allocation1 [shape = 'u32[144,128]{1,0:T(1,128)}', space=vmem, size = 0x12000, scoped, tag = 'internal scratch']
  %s0 = inlined_call_operand.hbm [shape: bf16[16,32], index: 0, kind: input, shape index: {}]
  %s1 = inlined_call_operand.hbm [shape: bf16[32,128], index: 1, kind: input, shape index: {}]
  %s2 = inlined_call_operand.vmem [shape: f32[1,128], index: 2, kind: input, shape index: {}]
  %s3 = inlined_call_operand.hbm [shape: bf16[128,128], index: 3, kind: input, shape index: {}]
  %s4 = inlined_call_operand.hbm [shape: bf16[16,128], index: 4, kind: output, shape index: {}]
  %s5 = sld [smem:[#allocation0]]
  $region38: #{tpu_custom_call.1} parent=0
    _
  %s7 = ssub.s32 1, %s5
  %s8 = scalar_select 0, %s7, %s5
  $region1: #{tpu_custom_call.1} parent=0
    #allocation2 [shape = 'u8[4096]{0}', space=vmem, size = 0x1000, scoped, tag = 'input window, operand 0, single buffered']
    #allocation3 [shape = 's32[1]{0}', space=sflag, size = 0x4, scoped, tag = 'scoped memory for tpu_custom_call.1']
    #allocation4 [shape = 's32[1]{0}', space=sflag, size = 0x4, scoped, tag = 'scoped memory for tpu_custom_call.1']
    #allocation5 [shape = 'u8[8192]{0}', space=vmem, size = 0x2000, scoped, tag = 'input window, operand 1, single buffered']
    #allocation6 [shape = 's32[1]{0}', space=sflag, size = 0x4, scoped, tag = 'scoped memory for tpu_custom_call.1']
    #allocation7 [shape = 'u8[32768]{0}', space=vmem, size = 0x8000, scoped, tag = 'input window, operand 3, single buffered']
    #allocation8 [shape = 'u8[4096]{0}', space=vmem, size = 0x1000, scoped, tag = 'output window, operand 0, single buffered']
    %9 = vsyncpa [#allocation3], 0
    %10 = vsyncpa [#allocation6], 0
    %11 = vsyncpa [#allocation4], 0
    // Predicated region
    $region2: #{tpu_custom_call.1} parent=1 // pred_check
      _
    $region3: #{tpu_custom_call.1} parent=1 // pred_check_branch
      %13 = sbr.rel (0) target = $region5
    $region4: #{tpu_custom_call.1} parent=1 // pred_region
      %s15 = ssub.s32 128, 128
      %16 = vsyncadd [#allocation3], %s15
      %s17 = sshll.u32 [#allocation2], 4
      %s18 = int_to_ptr.vmem [resolvable:$true] %s17
      %23 = dma.hbm_to_vmem [thread:$0]  %s0, 128, %s18, [#allocation3], 64, 64, 4
    $region5: #{tpu_custom_call.1} parent=1 // pred_fallthru
      _
    // Predicated region
    $region6: #{tpu_custom_call.1} parent=1 // pred_check
      _
    $region7: #{tpu_custom_call.1} parent=1 // pred_check_branch
      %25 = sbr.rel (0) target = $region9
    $region8: #{tpu_custom_call.1} parent=1 // pred_region
      %s27 = ssub.s32 256, 256
      %28 = vsyncadd [#allocation6], %s27
      %s29 = sshll.u32 [#allocation5], 4
      %s30 = int_to_ptr.vmem [resolvable:$true] %s29
      %35 = dma.hbm_to_vmem [thread:$0]  %s1, 256, %s30, [#allocation6], 64, 64, 4
    $region9: #{tpu_custom_call.1} parent=1 // pred_fallthru
      _
    // Predicated region
    $region10: #{tpu_custom_call.1} parent=1 // pred_check
      _
    $region11: #{tpu_custom_call.1} parent=1 // pred_check_branch
      %37 = sbr.rel (0) target = $region13
    $region12: #{tpu_custom_call.1} parent=1 // pred_region
      _
    $region13: #{tpu_custom_call.1} parent=1 // pred_fallthru
      _
    // Predicated region
    $region14: #{tpu_custom_call.1} parent=1 // pred_check
      _
    $region15: #{tpu_custom_call.1} parent=1 // pred_check_branch
      %39 = sbr.rel (0) target = $region17
    $region16: #{tpu_custom_call.1} parent=1 // pred_region
      %s41 = ssub.s32 1024, 1024
      %42 = vsyncadd [#allocation6], %s41
      %s43 = sshll.u32 [#allocation7], 4
      %s44 = int_to_ptr.vmem [resolvable:$true] %s43
      %49 = dma.hbm_to_vmem [thread:$0]  %s3, 1024, %s44, [#allocation6], 64, 64, 4
    $region17: #{tpu_custom_call.1} parent=1 // pred_fallthru
      _
    // Predicated region
    $region18: #{tpu_custom_call.1} parent=1 // pred_check
      _
    $region19: #{tpu_custom_call.1} parent=1 // pred_check_branch
      %51 = sbr.rel (0) target = $region21
    $region20: #{tpu_custom_call.1} parent=1 // pred_region
      %52 = dma.done [#allocation3], 128
    $region21: #{tpu_custom_call.1} parent=1 // pred_fallthru
      _
    // Predicated region
    $region22: #{tpu_custom_call.1} parent=1 // pred_check
      _
    $region23: #{tpu_custom_call.1} parent=1 // pred_check_branch
      %54 = sbr.rel (0) target = $region25
    $region24: #{tpu_custom_call.1} parent=1 // pred_region
      %55 = dma.done [#allocation6], 256
    $region25: #{tpu_custom_call.1} parent=1 // pred_fallthru
      _
    // Predicated region
    $region26: #{tpu_custom_call.1} parent=1 // pred_check
      _
    $region27: #{tpu_custom_call.1} parent=1 // pred_check_branch
      %57 = sbr.rel (0) target = $region29
    $region28: #{tpu_custom_call.1} parent=1 // pred_region
      %58 = dma.done [#allocation6], 1024
    $region29: #{tpu_custom_call.1} parent=1 // pred_fallthru
      _
    %v60 = vld [vmem:[#allocation2] sm:$0xf]
    %v61 = vld [vmem:[#allocation2 + $0x4] sm:$0xf]
    %v62 = vld [vmem:[#allocation5] sm:$0xf]
    %v63 = vld [vmem:[#allocation5 + $0x4] sm:$0xf]
    %v64 = vld [vmem:[#allocation5 + $0x8] sm:$0xf]
    %v65 = vld [vmem:[#allocation5 + $0xc] sm:$0xf]
    %v66 = vld [vmem:[%s2] sm:$0x1]
    %v68 = vlaneseq
    %v69 = vshrl.u32 %v68, 7
    %v70 = vsub.s32 0, %v69
    %v71 = vrot.slane %v66, %v70
    %v75 = vunpack.c.l.b16 %v60
    %v76 = vunpack.c.l.b16 %v61
    %v77 = vpack.c.b16 %v76, %v75
    %v82 = vunpack.c.l.b16 %v62
    %v83 = vunpack.c.l.b16 %v63
    %v84 = vunpack.c.l.b16 %v64
    %v85 = vunpack.c.l.b16 %v65
    %v86 = vpack.c.b16 %v83, %v82
    %v87 = vpack.c.b16 %v85, %v84
    %vm90 = vcmask 261120
    %v92 = vsel %vm90, %v77, 0
    %94 = vmatprep.subr.bf16.mxu0 0
    %95 = vmatpush1.bf16.msra.mxu0 %v86
    %96 = vmatprep.subr.bf16.mxu0 0
    %97 = vmatpush1.bf16.msra.mxu0 %v87
    %98 = vmatprep.subr.bf16.mxu0 0
    %99 = vmatpush1.bf16.msra.mxu0 0
    %100 = vmatprep.subr.bf16.mxu0 0
    %101 = vmatpush1.bf16.msra.mxu0 0
    %102 = vmatprep.subr.bf16.mxu0 0
    %103 = vmatpush1.bf16.msra.mxu0 0
    %104 = vmatprep.subr.bf16.mxu0 0
    %105 = vmatpush1.bf16.msra.mxu0 0
    %106 = vmatprep.subr.bf16.mxu0 0
    %107 = vmatpush1.bf16.msra.mxu0 0
    %108 = vmatprep.subr.bf16.mxu0 0
    %109 = vmatpush1.bf16.msra.mxu0 0
    %110 = vmatprep.subr.bf16.mxu0 0
    %111 = vmatpush1.bf16.msra.mxu0 0
    %112 = vmatprep.subr.bf16.mxu0 0
    %113 = vmatpush1.bf16.msra.mxu0 0
    %114 = vmatprep.subr.bf16.mxu0 0
    %115 = vmatpush1.bf16.msra.mxu0 0
    %116 = vmatprep.subr.bf16.mxu0 0
    %117 = vmatpush1.bf16.msra.mxu0 0
    %118 = vmatprep.subr.bf16.mxu0 0
    %119 = vmatpush1.bf16.msra.mxu0 0
    %120 = vmatprep.subr.bf16.mxu0 0
    %121 = vmatpush1.bf16.msra.mxu0 0
    %122 = vmatprep.subr.bf16.mxu0 0
    %123 = vmatpush1.bf16.msra.mxu0 0
    %124 = vmatprep.subr.bf16.mxu0 0
    %125 = vmatpush1.bf16.msra.mxu0 0
    %126 = vmatprep.mubr.bf16.mxu0 0
    %127 = vmatmul.mubr.bf16.gmra.mrb[0].mxu0 %v92
    %v128 = vpop.f32.mrb[0].mxu0
    %v129 = vadd.f32 %v71, %v128
    %v130 = vpop.f32.mrb[0].mxu0
    %v131 = vpop.f32.mrb[0].mxu0
    %v132 = vadd.f32 %v71, %v131
    %v133 = vpop.f32.mrb[0].mxu0
    %134 = vdwg.mxu0
    %v135 = vmax.f32 %v129, 0.0
    %v136 = vmax.f32 %v132, 0.0
    %v137 = vpack.c.bf16 %v136, %v135
    %v138 = vld [vmem:[#allocation7] sm:$0xf]
    %v139 = vld [vmem:[#allocation7 + $0x4] sm:$0xf]
    %v140 = vld [vmem:[#allocation7 + $0x8] sm:$0xf]
    %v141 = vld [vmem:[#allocation7 + $0xc] sm:$0xf]
    %v142 = vld [vmem:[#allocation7 + $0x10] sm:$0xf]
    %v143 = vld [vmem:[#allocation7 + $0x14] sm:$0xf]
    %v144 = vld [vmem:[#allocation7 + $0x18] sm:$0xf]
    %v145 = vld [vmem:[#allocation7 + $0x1c] sm:$0xf]
    %v146 = vld [vmem:[#allocation7 + $0x20] sm:$0xf]
    %v147 = vld [vmem:[#allocation7 + $0x24] sm:$0xf]
    %v148 = vld [vmem:[#allocation7 + $0x28] sm:$0xf]
    %v149 = vld [vmem:[#allocation7 + $0x2c] sm:$0xf]
    %v150 = vld [vmem:[#allocation7 + $0x30] sm:$0xf]
    %v151 = vld [vmem:[#allocation7 + $0x34] sm:$0xf]
    %v152 = vld [vmem:[#allocation7 + $0x38] sm:$0xf]
    %v153 = vld [vmem:[#allocation7 + $0x3c] sm:$0xf]
    %v170 = vunpack.c.l.b16 %v138
    %v171 = vunpack.c.l.b16 %v139
    %v172 = vunpack.c.l.b16 %v140
    %v173 = vunpack.c.l.b16 %v141
    %v174 = vunpack.c.l.b16 %v142
    %v175 = vunpack.c.l.b16 %v143
    %v176 = vunpack.c.l.b16 %v144
    %v177 = vunpack.c.l.b16 %v145
    %v178 = vunpack.c.l.b16 %v146
    %v179 = vunpack.c.l.b16 %v147
    %v180 = vunpack.c.l.b16 %v148
    %v181 = vunpack.c.l.b16 %v149
    %v182 = vunpack.c.l.b16 %v150
    %v183 = vunpack.c.l.b16 %v151
    %v184 = vunpack.c.l.b16 %v152
    %v185 = vunpack.c.l.b16 %v153
    %v186 = vpack.c.b16 %v171, %v170
    %v187 = vpack.c.b16 %v173, %v172
    %v188 = vpack.c.b16 %v175, %v174
    %v189 = vpack.c.b16 %v177, %v176
    %v190 = vpack.c.b16 %v179, %v178
    %v191 = vpack.c.b16 %v181, %v180
    %v192 = vpack.c.b16 %v183, %v182
    %v193 = vpack.c.b16 %v185, %v184
    %202 = vmatprep.subr.bf16.mxu0 0
    %203 = vmatpush1.bf16.msra.mxu0 %v186
    %204 = vmatprep.subr.bf16.mxu0 0
    %205 = vmatpush1.bf16.msra.mxu0 %v187
    %206 = vmatprep.subr.bf16.mxu0 0
    %207 = vmatpush1.bf16.msra.mxu0 %v188
    %208 = vmatprep.subr.bf16.mxu0 0
    %209 = vmatpush1.bf16.msra.mxu0 %v189
    %210 = vmatprep.subr.bf16.mxu0 0
    %211 = vmatpush1.bf16.msra.mxu0 %v190
    %212 = vmatprep.subr.bf16.mxu0 0
    %213 = vmatpush1.bf16.msra.mxu0 %v191
    %214 = vmatprep.subr.bf16.mxu0 0
    %215 = vmatpush1.bf16.msra.mxu0 %v192
    %216 = vmatprep.subr.bf16.mxu0 0
    %217 = vmatpush1.bf16.msra.mxu0 %v193
    %218 = vmatprep.subr.bf16.mxu0 0
    %219 = vmatpush1.bf16.msra.mxu0 0
    %220 = vmatprep.subr.bf16.mxu0 0
    %221 = vmatpush1.bf16.msra.mxu0 0
    %222 = vmatprep.subr.bf16.mxu0 0
    %223 = vmatpush1.bf16.msra.mxu0 0
    %224 = vmatprep.subr.bf16.mxu0 0
    %225 = vmatpush1.bf16.msra.mxu0 0
    %226 = vmatprep.subr.bf16.mxu0 0
    %227 = vmatpush1.bf16.msra.mxu0 0
    %228 = vmatprep.subr.bf16.mxu0 0
    %229 = vmatpush1.bf16.msra.mxu0 0
    %230 = vmatprep.subr.bf16.mxu0 0
    %231 = vmatpush1.bf16.msra.mxu0 0
    %232 = vmatprep.subr.bf16.mxu0 0
    %233 = vmatpush1.bf16.msra.mxu0 0
    %234 = vmatprep.mubr.bf16.mxu0 0
    %235 = vmatmul.mubr.bf16.gmra.mrb[0].mxu0 %v137
    %v236 = vpop.f32.mrb[0].mxu0
    %v237 = vadd.f32 0.0, %v236
    %v238 = vpop.f32.mrb[0].mxu0
    %v239 = vpop.f32.mrb[0].mxu0
    %v240 = vadd.f32 0.0, %v239
    %v241 = vpop.f32.mrb[0].mxu0
    %242 = vdwg.mxu0
    %v243 = vxor.u32 %v237, 2147483648
    %v244 = vxor.u32 %v240, 2147483648
    %v245 = vmul.f32 %v243, 1.442695
    %v246 = vpow.pop %v245
    %v247 = vmul.f32 %v244, 1.442695
    %v248 = vpow.pop %v247
    %v249 = vadd.f32 %v246, 1.0
    %v250 = vadd.f32 %v248, 1.0
    %v251 = vrcp.pop %v249
    %v252 = vmul.f32 1.0, %v251
    %v253 = vrcp.pop %v250
    %v254 = vmul.f32 1.0, %v253
    %v255 = vpack.c.bf16 %v254, %v252
    %v257 = vunpack.c.l.b16 %v255
    %v258 = vunpack.c.h.b16 %v255
    %v259 = vpack.c.b16 %v257, %v257
    %v260 = vpack.c.b16 %v258, %v258
    %263 = vst [vmem:[#allocation8] sm:$0xf] %v259
    %264 = vst [vmem:[#allocation8 + $0x4] sm:$0xf] %v260
    // Predicated region
    $region30: #{tpu_custom_call.1} parent=1 // pred_check
      _
    $region31: #{tpu_custom_call.1} parent=1 // pred_check_branch
      %266 = sbr.rel (0) target = $region33
    $region32: #{tpu_custom_call.1} parent=1 // pred_region
      %s268 = ssub.s32 128, 128
      %269 = vsyncadd [#allocation4], %s268
      %s270 = sshll.u32 [#allocation8], 4
      %s271 = int_to_ptr.vmem [resolvable:$true] %s270
      %276 = dma.vmem_to_hbm [thread:$0]  %s271, 128, %s4, [#allocation4], 64, 64, 4
    $region33: #{tpu_custom_call.1} parent=1 // pred_fallthru
      _
    // Predicated region
    $region34: #{tpu_custom_call.1} parent=1 // pred_check
      _
    $region35: #{tpu_custom_call.1} parent=1 // pred_check_branch
      %278 = sbr.rel (0) target = $region37
    $region36: #{tpu_custom_call.1} parent=1 // pred_region
      %279 = dma.done [#allocation4], 128
    $region37: #{tpu_custom_call.1} parent=1 // pred_fallthru
      _
    %280 = vsyncpa [#allocation3], 1
    %281 = vsyncpa [#allocation6], 1
    %282 = vsyncpa [#allocation4], 1

</llo_original>
